<compile_context>
chip_gen: v7x
topology: tpu7x:2x2x1
jax: 0.10.0
libtpu: 0.0.40
codegen_flags: <defaults>
</compile_context>

<pallas_src>
import functools

import jax
import jax.numpy as jnp
from jax.experimental import pallas as pl
from jax.experimental.pallas import tpu as pltpu

_LANES = 128          # TPU lane width; pi head is padded to a multiple of this.
_NEG_BIG = -1e30      # finite "minus infinity" for padded logits (exp -> 0, never NaN)


def _dot_f32(a, w):
    # Cast the activation to the weight dtype (no-op for f32 weights; native bf16 MXU path
    # when weights are bf16) and accumulate in f32.
    return jnp.dot(a.astype(w.dtype), w, preferred_element_type=jnp.float32)


def _actor_kernel(x_ref, w1_ref, b1_ref, w2_ref, b2_ref, w3_ref, b3_ref, out_ref):
    # x/out blocks carry a leading size-1 agent dim; weights/biases are full stacks resident
    # in VMEM and indexed by the agent grid position.
    a = pl.program_id(0)
    x = x_ref[0].astype(jnp.float32)

    # fc1 + relu
    h1 = _dot_f32(x, w1_ref[a]) + b1_ref[a].astype(jnp.float32)
    h1 = jnp.maximum(h1, 0.0)

    # fc2 + relu
    h2 = _dot_f32(h1, w2_ref[a]) + b2_ref[a].astype(jnp.float32)
    h2 = jnp.maximum(h2, 0.0)

    # pi head (lane-padded) + numerically-stable softmax over actions.
    # Padded lanes have bias -1e30 -> exp underflows to exactly 0, so they contribute
    # nothing to the denominator and the real lanes match an un-padded softmax.
    logits = _dot_f32(h2, w3_ref[a]) + b3_ref[a].astype(jnp.float32)
    m = jnp.max(logits, axis=-1, keepdims=True)
    e = jnp.exp(logits - m)
    denom = jnp.sum(e, axis=-1, keepdims=True)
    inv = 1.0 / denom          # exact f32 reciprocal: one divide per row, rows sum to 1
    out_ref[0] = (e * inv).astype(out_ref.dtype)


@functools.partial(jax.jit, static_argnames=("batch_tile",))
def actor_forward(states, w1, b1, w2, b2, w3, b3, *, batch_tile=None):
    """Fused forward for a stack of MADDPG actors.

    states: (n_agents, batch, input_dims)               float32 (or bf16)
    wK:     (n_agents, in_features, out_features)       f32 or bf16 (transposed vs torch Linear)
    bK:     (n_agents, 1, out_features)
    returns (n_agents, batch, n_actions) float32 action probabilities.
    """
    n_agents, batch, input_dims = states.shape
    n_actions = w3.shape[-1]

    # --- lane-dense pi head: pad to a multiple of 128 output lanes -------------------------
    padded_actions = ((n_actions + _LANES - 1) // _LANES) * _LANES
    pad = padded_actions - n_actions
    if pad:
        w3 = jnp.pad(w3, ((0, 0), (0, 0), (0, pad)))                       # zero weights
        b3 = jnp.pad(b3.astype(jnp.float32), ((0, 0), (0, 0), (0, pad)),
                     constant_values=_NEG_BIG)                             # -1e30 bias

    # --- batch tiling ----------------------------------------------------------------------
    if batch_tile is None:
        batch_tile = batch
        # Amortize the ~0.35us/grid-step fixed cost with big tiles, capped for VMEM safety.
        while batch_tile > 1024 and batch_tile % 16 == 0:
            batch_tile //= 2
        # v7x megacore: make sure the grid exposes >= 2 parallel tiles for the 2nd TensorCore.
        while n_agents * (batch // batch_tile) < 2 and batch_tile % 16 == 0 and batch_tile > 8:
            batch_tile //= 2
    assert batch % batch_tile == 0, "batch must be divisible by batch_tile"
    assert batch_tile == batch or batch_tile % 8 == 0

    grid = (n_agents, batch // batch_tile)

    # Weights/biases: the FULL agent stack stays resident in VMEM (constant block index),
    # so weight residency does not depend on grid iteration order / megacore interleave.
    def resident(arr):
        return pl.BlockSpec(arr.shape, lambda a, b: (0, 0, 0))

    in_specs = [
        pl.BlockSpec((1, batch_tile, input_dims), lambda a, b: (a, b, 0)),  # state
        resident(w1), resident(b1),
        resident(w2), resident(b2),
        resident(w3), resident(b3),
    ]
    # Lane-dense output slab: (batch_tile, padded_actions) with padded_actions % 128 == 0.
    out_specs = pl.BlockSpec((1, batch_tile, padded_actions), lambda a, b: (a, b, 0))

    out = pl.pallas_call(
        _actor_kernel,
        out_shape=jax.ShapeDtypeStruct((n_agents, batch, padded_actions), jnp.float32),
        grid=grid,
        in_specs=in_specs,
        out_specs=out_specs,
        compiler_params=pltpu.CompilerParams(
            dimension_semantics=("parallel", "parallel"),
            vmem_limit_bytes=32 * 1024 * 1024,   # safe on v7x's 64 MiB physical VMEM
        ),
    )(states, w1, b1, w2, b2, w3, b3)

    return out[..., :n_actions]


def init_stacked_linear(key, n_agents, fan_in, fan_out, dtype=jnp.float32):
    """torch.nn.Linear default init (uniform +/- 1/sqrt(fan_in)), stacked over agents.

    W: (n_agents, fan_in, fan_out) (transposed vs torch), b: (n_agents, 1, fan_out).
    """
    kw, kb = jax.random.split(key)
    bound = 1.0 / float(fan_in) ** 0.5
    w = jax.random.uniform(kw, (n_agents, fan_in, fan_out), jnp.float32, -bound, bound)
    b = jax.random.uniform(kb, (n_agents, 1, fan_out), jnp.float32, -bound, bound)
    return w.astype(dtype), b.astype(dtype)


def reference_forward(states, w1, b1, w2, b2, w3, b3):
    f32 = lambda t: t.astype(jnp.float32)
    h1 = jnp.maximum(jnp.einsum("abi,aio->abo", f32(states), f32(w1)) + f32(b1), 0.0)
    h2 = jnp.maximum(jnp.einsum("abi,aio->abo", h1, f32(w2)) + f32(b2), 0.0)
    logits = jnp.einsum("abi,aio->abo", h2, f32(w3)) + f32(b3)
    return jax.nn.softmax(logits, axis=-1)


if __name__ == "__main__":
    # Small shapes consistent with the module; several agents (actors + target actors) fused
    # into one call.  Hidden dims lane-padded to 128 (use 256 on v6e/v7x to fill the 256-wide
    # MXU tile if the width is a free parameter; 128 is already optimal on v5e).
    n_agents = 4
    batch = 64
    input_dims = 16
    fc1_dims = 128
    fc2_dims = 128
    n_actions = 4

    key = jax.random.PRNGKey(0)
    k_state, k1, k2, k3 = jax.random.split(key, 4)

    states = jax.random.normal(k_state, (n_agents, batch, input_dims), jnp.float32)
    w1, b1 = init_stacked_linear(k1, n_agents, input_dims, fc1_dims)
    w2, b2 = init_stacked_linear(k2, n_agents, fc1_dims, fc2_dims)
    w3, b3 = init_stacked_linear(k3, n_agents, fc2_dims, n_actions)

    # --- f32 path: tight check against the pure-JAX reference --------------------------------
    pi = actor_forward(states, w1, b1, w2, b2, w3, b3)
    pi = jax.block_until_ready(pi)
    ref = reference_forward(states, w1, b1, w2, b2, w3, b3)
    assert pi.shape == (n_agents, batch, n_actions)
    assert jnp.allclose(pi, ref, atol=1e-4, rtol=1e-4)
    assert jnp.allclose(jnp.sum(pi, axis=-1), 1.0, atol=1e-4)

    # --- bf16 MXU path: halves weight DMA; compare against the same bf16 weights in f32 ------
    w1b, w2b, w3b = (w.astype(jnp.bfloat16) for w in (w1, w2, w3))
    pi_bf16 = actor_forward(states, w1b, b1, w2b, b2, w3b, b3)
    pi_bf16 = jax.block_until_ready(pi_bf16)
    ref_bf16 = reference_forward(states, w1b, b1, w2b, b2, w3b, b3)
    assert jnp.allclose(pi_bf16, ref_bf16, atol=1e-2, rtol=1e-2)
    assert jnp.allclose(jnp.sum(pi_bf16, axis=-1), 1.0, atol=1e-4)

    print("KERNEL_OK")
</pallas_src>

<mosaic_0001>
module attributes {stable_mosaic.version = 11 : i64} {
  func.func @_actor_kernel(%arg0: i32, %arg1: i32, %arg2: memref<1x64x16xf32, #tpu.memory_space<vmem>>, %arg3: memref<4x16x128xf32, #tpu.memory_space<vmem>>, %arg4: memref<4x1x128xf32, #tpu.memory_space<vmem>>, %arg5: memref<4x128x128xf32, #tpu.memory_space<vmem>>, %arg6: memref<4x1x128xf32, #tpu.memory_space<vmem>>, %arg7: memref<4x128x128xf32, #tpu.memory_space<vmem>>, %arg8: memref<4x1x128xf32, #tpu.memory_space<vmem>>, %arg9: memref<1x64x128xf32, #tpu.memory_space<vmem>>) attributes {dimension_semantics = [#tpu.dimension_semantics<parallel>, #tpu.dimension_semantics<parallel>], iteration_bounds = array<i64: 4, 1>, scalar_prefetch = 0 : i64, scratch_operands = 0 : i64, tpu.core_type = #tpu.core_type<tc>, window_params = [{transform_indices = @transform_0, window_bounds = array<i64: 1, 64, 16>}, {pipeline_mode = #tpu.pipeline_mode<synchronous>, transform_indices = @transform_1, window_bounds = array<i64: 4, 16, 128>}, {pipeline_mode = #tpu.pipeline_mode<synchronous>, transform_indices = @transform_2, window_bounds = array<i64: 4, 1, 128>}, {pipeline_mode = #tpu.pipeline_mode<synchronous>, transform_indices = @transform_3, window_bounds = array<i64: 4, 128, 128>}, {pipeline_mode = #tpu.pipeline_mode<synchronous>, transform_indices = @transform_4, window_bounds = array<i64: 4, 1, 128>}, {pipeline_mode = #tpu.pipeline_mode<synchronous>, transform_indices = @transform_5, window_bounds = array<i64: 4, 128, 128>}, {pipeline_mode = #tpu.pipeline_mode<synchronous>, transform_indices = @transform_6, window_bounds = array<i64: 4, 1, 128>}, {transform_indices = @transform_7, window_bounds = array<i64: 1, 64, 128>}]} {
    %c0 = arith.constant 0 : index
    %c0_0 = arith.constant 0 : index
    %c0_1 = arith.constant 0 : index
    %0 = vector.load %arg2[%c0, %c0_0, %c0_1] : memref<1x64x16xf32, #tpu.memory_space<vmem>>, vector<1x64x16xf32>
    %1 = vector.shape_cast %0 : vector<1x64x16xf32> to vector<64x16xf32>
    %2 = arith.index_cast %arg0 : i32 to index
    %c0_2 = arith.constant 0 : index
    %c0_3 = arith.constant 0 : index
    %3 = vector.load %arg3[%2, %c0_2, %c0_3] : memref<4x16x128xf32, #tpu.memory_space<vmem>>, vector<1x16x128xf32>
    %4 = vector.shape_cast %3 : vector<1x16x128xf32> to vector<16x128xf32>
    %cst = arith.constant dense<0.000000e+00> : vector<64x128xf32>
    %5 = tpu.matmul %1, %4, %cst {dimension_numbers = #tpu.dot_dimension_numbers<[1], [0], [0], [1], [0, 0, 1, 1], [], []>} : vector<64x16xf32>, vector<16x128xf32>, vector<64x128xf32> -> vector<64x128xf32>
    %6 = arith.index_cast %arg0 : i32 to index
    %c0_4 = arith.constant 0 : index
    %c0_5 = arith.constant 0 : index
    %7 = vector.load %arg4[%6, %c0_4, %c0_5] : memref<4x1x128xf32, #tpu.memory_space<vmem>>, vector<1x1x128xf32>
    %8 = vector.shape_cast %7 : vector<1x1x128xf32> to vector<1x128xf32>
    %9 = vector.broadcast %8 : vector<1x128xf32> to vector<64x128xf32>
    %10 = arith.addf %5, %9 : vector<64x128xf32>
    %cst_6 = arith.constant 0.000000e+00 : f32
    %11 = vector.broadcast %cst_6 : f32 to vector<64x128xf32>
    %12 = arith.maximumf %10, %11 : vector<64x128xf32>
    %13 = arith.index_cast %arg0 : i32 to index
    %c0_7 = arith.constant 0 : index
    %c0_8 = arith.constant 0 : index
    %14 = vector.load %arg5[%13, %c0_7, %c0_8] : memref<4x128x128xf32, #tpu.memory_space<vmem>>, vector<1x128x128xf32>
    %15 = vector.shape_cast %14 : vector<1x128x128xf32> to vector<128x128xf32>
    %cst_9 = arith.constant dense<0.000000e+00> : vector<64x128xf32>
    %16 = tpu.matmul %12, %15, %cst_9 {dimension_numbers = #tpu.dot_dimension_numbers<[1], [0], [0], [1], [0, 0, 1, 1], [], []>} : vector<64x128xf32>, vector<128x128xf32>, vector<64x128xf32> -> vector<64x128xf32>
    %17 = arith.index_cast %arg0 : i32 to index
    %c0_10 = arith.constant 0 : index
    %c0_11 = arith.constant 0 : index
    %18 = vector.load %arg6[%17, %c0_10, %c0_11] : memref<4x1x128xf32, #tpu.memory_space<vmem>>, vector<1x1x128xf32>
    %19 = vector.shape_cast %18 : vector<1x1x128xf32> to vector<1x128xf32>
    %20 = vector.broadcast %19 : vector<1x128xf32> to vector<64x128xf32>
    %21 = arith.addf %16, %20 : vector<64x128xf32>
    %cst_12 = arith.constant 0.000000e+00 : f32
    %22 = vector.broadcast %cst_12 : f32 to vector<64x128xf32>
    %23 = arith.maximumf %21, %22 : vector<64x128xf32>
    %24 = arith.index_cast %arg0 : i32 to index
    %c0_13 = arith.constant 0 : index
    %c0_14 = arith.constant 0 : index
    %25 = vector.load %arg7[%24, %c0_13, %c0_14] : memref<4x128x128xf32, #tpu.memory_space<vmem>>, vector<1x128x128xf32>
    %26 = vector.shape_cast %25 : vector<1x128x128xf32> to vector<128x128xf32>
    %cst_15 = arith.constant dense<0.000000e+00> : vector<64x128xf32>
    %27 = tpu.matmul %23, %26, %cst_15 {dimension_numbers = #tpu.dot_dimension_numbers<[1], [0], [0], [1], [0, 0, 1, 1], [], []>} : vector<64x128xf32>, vector<128x128xf32>, vector<64x128xf32> -> vector<64x128xf32>
    %28 = arith.index_cast %arg0 : i32 to index
    %c0_16 = arith.constant 0 : index
    %c0_17 = arith.constant 0 : index
    %29 = vector.load %arg8[%28, %c0_16, %c0_17] : memref<4x1x128xf32, #tpu.memory_space<vmem>>, vector<1x1x128xf32>
    %30 = vector.shape_cast %29 : vector<1x1x128xf32> to vector<1x128xf32>
    %31 = vector.broadcast %30 : vector<1x128xf32> to vector<64x128xf32>
    %32 = arith.addf %27, %31 : vector<64x128xf32>
    %cst_18 = arith.constant dense<0xFF800000> : vector<64xf32>
    %33 = vector.multi_reduction <maximumf>, %32, %cst_18 [1] : vector<64x128xf32> to vector<64xf32>
    %34 = vector.shape_cast %33 : vector<64xf32> to vector<64x1xf32>
    %35 = vector.broadcast %34 : vector<64x1xf32> to vector<64x128xf32>
    %36 = arith.subf %32, %35 : vector<64x128xf32>
    %37 = math.exp %36 : vector<64x128xf32>
    %cst_19 = arith.constant dense<0.000000e+00> : vector<64xf32>
    %38 = vector.multi_reduction <add>, %37, %cst_19 [1] : vector<64x128xf32> to vector<64xf32>
    %39 = vector.shape_cast %38 : vector<64xf32> to vector<64x1xf32>
    %cst_20 = arith.constant 1.000000e+00 : f32
    %40 = vector.broadcast %cst_20 : f32 to vector<64x1xf32>
    %41 = arith.divf %40, %39 : vector<64x1xf32>
    %42 = vector.broadcast %41 : vector<64x1xf32> to vector<64x128xf32>
    %43 = arith.mulf %37, %42 : vector<64x128xf32>
    %c0_21 = arith.constant 0 : index
    %c0_22 = arith.constant 0 : index
    %c0_23 = arith.constant 0 : index
    %44 = vector.load %arg9[%c0_21, %c0_22, %c0_23] : memref<1x64x128xf32, #tpu.memory_space<vmem>>, vector<1x64x128xf32>
    %45 = vector.shape_cast %44 : vector<1x64x128xf32> to vector<64x128xf32>
    %46 = vector.shape_cast %43 : vector<64x128xf32> to vector<1x64x128xf32>
    tpu.vector_store %arg9[%c0_21, %c0_22, %c0_23], %46 {strides = array<i32>} : memref<1x64x128xf32, #tpu.memory_space<vmem>>, vector<1x64x128xf32>,
    return
  }
  func.func @transform_0(%arg0: i32, %arg1: i32) -> (i32, i32, i32) {
    %c0_i32 = arith.constant 0 : i32
    %c0_i32_0 = arith.constant 0 : i32
    return %arg0, %arg1, %c0_i32 : i32, i32, i32
  }
  func.func @transform_1(%arg0: i32, %arg1: i32) -> (i32, i32, i32) {
    %c0_i32 = arith.constant 0 : i32
    %c0_i32_0 = arith.constant 0 : i32
    %c0_i32_1 = arith.constant 0 : i32
    %c0_i32_2 = arith.constant 0 : i32
    return %c0_i32, %c0_i32_0, %c0_i32_1 : i32, i32, i32
  }
  func.func @transform_2(%arg0: i32, %arg1: i32) -> (i32, i32, i32) {
    %c0_i32 = arith.constant 0 : i32
    %c0_i32_0 = arith.constant 0 : i32
    %c0_i32_1 = arith.constant 0 : i32
    %c0_i32_2 = arith.constant 0 : i32
    return %c0_i32, %c0_i32_0, %c0_i32_1 : i32, i32, i32
  }
  func.func @transform_3(%arg0: i32, %arg1: i32) -> (i32, i32, i32) {
    %c0_i32 = arith.constant 0 : i32
    %c0_i32_0 = arith.constant 0 : i32
    %c0_i32_1 = arith.constant 0 : i32
    %c0_i32_2 = arith.constant 0 : i32
    return %c0_i32, %c0_i32_0, %c0_i32_1 : i32, i32, i32
  }
  func.func @transform_4(%arg0: i32, %arg1: i32) -> (i32, i32, i32) {
    %c0_i32 = arith.constant 0 : i32
    %c0_i32_0 = arith.constant 0 : i32
    %c0_i32_1 = arith.constant 0 : i32
    %c0_i32_2 = arith.constant 0 : i32
    return %c0_i32, %c0_i32_0, %c0_i32_1 : i32, i32, i32
  }
  func.func @transform_5(%arg0: i32, %arg1: i32) -> (i32, i32, i32) {
    %c0_i32 = arith.constant 0 : i32
    %c0_i32_0 = arith.constant 0 : i32
    %c0_i32_1 = arith.constant 0 : i32
    %c0_i32_2 = arith.constant 0 : i32
    return %c0_i32, %c0_i32_0, %c0_i32_1 : i32, i32, i32
  }
  func.func @transform_6(%arg0: i32, %arg1: i32) -> (i32, i32, i32) {
    %c0_i32 = arith.constant 0 : i32
    %c0_i32_0 = arith.constant 0 : i32
    %c0_i32_1 = arith.constant 0 : i32
    %c0_i32_2 = arith.constant 0 : i32
    return %c0_i32, %c0_i32_0, %c0_i32_1 : i32, i32, i32
  }
  func.func @transform_7(%arg0: i32, %arg1: i32) -> (i32, i32, i32) {
    %c0_i32 = arith.constant 0 : i32
    %c0_i32_0 = arith.constant 0 : i32
    return %arg0, %arg1, %c0_i32 : i32, i32, i32
  }
}

</mosaic_0001>

<llo_original>
// kernel: actor_forward.1
$region0: #{actor_forward.1}
  #allocation0 [shape = 'u32[]', space=smem, size = 0x4, offset = 0x4, fixed_abs, tag = 'smem constant byte address 0x4 - core index']
  #allocation1 [shape = 'u32[144,128]{1,0:T(1,128)}', space=vmem, size = 0x12000, scoped, tag = 'internal scratch']
  %s0 = inlined_call_operand.vmem [shape: f32[4,64,16], index: 0, kind: input, shape index: {}]
  %s1 = inlined_call_operand.vmem [shape: f32[4,16,128], index: 1, kind: input, shape index: {}]
  %s2 = inlined_call_operand.vmem [shape: f32[4,1,128], index: 2, kind: input, shape index: {}]
  %s3 = inlined_call_operand.vmem [shape: f32[4,128,128], index: 3, kind: input, shape index: {}]
  %s4 = inlined_call_operand.vmem [shape: f32[4,1,128], index: 4, kind: input, shape index: {}]
  %s5 = inlined_call_operand.vmem [shape: f32[4,128,128], index: 5, kind: input, shape index: {}]
  %s6 = inlined_call_operand.vmem [shape: f32[4,1,128], index: 6, kind: input, shape index: {}]
  %s7 = inlined_call_operand.vmem [shape: f32[4,64,128], index: 7, kind: output, shape index: {}]
  %s8 = sld [smem:[#allocation0]]
  $region61: #{actor_forward.1} parent=0
    _
  %s10 = ssub.s32 1, %s8
  %s11 = scalar_select 0, %s10, %s8
  loop: start=0, step=1, limit=6
  $region2: #{actor_forward.1} parent=0 // loop_pre_header
    _
  $region3: #{actor_forward.1} parent=0 // loop_header
    %s13 = sphi 0, %s17
    %p14 = scmp.ge.s32.totalorder %s13, 6
    %s20 = sphi 0, %s32
    %s21 = sphi 0, %s28
    %s22 = sphi 0, %s20
    %s23 = sphi 0, %s21
    %s24 = sphi 0, %s22
    %s25 = sphi 0, %s23
    %s37 = sphi 0, %s39
    %s40 = sphi 0, %s37
    %s41 = sphi 0, %s40
    %s57 = sphi 0, %s41
    %s61 = sphi 0, %s61
    %s63 = sphi 0, %s61
    %s64 = sphi 0, %s63
    %s78 = sphi 0, %s64
    %s82 = sphi 0, %s82
    %s84 = sphi 0, %s82
    %s85 = sphi 0, %s84
    %s99 = sphi 0, %s85
    %s103 = sphi 0, %s103
    %s105 = sphi 0, %s103
    %s106 = sphi 0, %s105
    %s120 = sphi 0, %s106
    %s124 = sphi 0, %s124
    %s126 = sphi 0, %s124
    %s127 = sphi 0, %s126
    %s141 = sphi 0, %s127
    %s145 = sphi 0, %s145
    %s147 = sphi 0, %s145
    %s148 = sphi 0, %s147
    %s162 = sphi 0, %s148
    %s166 = sphi 0, %s166
    %s168 = sphi 0, %s166
    %s169 = sphi 0, %s168
    %s183 = sphi 0, %s169
    %s191 = sphi 0, %s193
    %s194 = sphi 0, %s191
    %s195 = sphi 0, %s194
    %s211 = sphi 0, %s195
  $region4: #{actor_forward.1} parent=0 // loop_header_branch
    %16 = sbr.rel (%p14) target = $region8
  $region5: #{actor_forward.1} parent=0 // loop_body
    %s18 = ssub.s32 %s13, 1
    %s19 = ssub.s32 %s13, 2
    %s26 = sadd.s32 1, %s21
    %p27 = scmp.ge.s32.totalorder %s26, 1
    %s28 = scalar_select %p27, 0, %s26
    %s29 = sadd.s32 1, %s20
    %s30 = scalar_select %p27, %s29, %s20
    %p31 = scmp.ge.s32.totalorder %s30, 4
    %s32 = scalar_select %p31, 0, %s30
    %s33 = ssub.s32 %s20, %s32
    %s34 = ssub.s32 %s21, %s28
    %s35 = sor.u32 %s33, %s34
    %p36 = scmp.eq.s32.totalorder %s35, 0
    %s38 = sadd.s32 %s37, 1
    %s39 = scalar_select %p36, %s37, %s38
    %p42 = pneg %p36
    %p43 = scmp.eq.s32.totalorder %s13, 3
    %p44 = por %p42, %p43
    %p45 = scmp.ne.s32.totalorder %s37, %s40
    %p46 = scmp.eq.s32.totalorder %s13, 0
    %p47 = por %p45, %p46
    %p48 = scmp.ne.s32.totalorder %s37, %s40
    %p49 = scmp.eq.s32.totalorder %s18, 3
    %p50 = por %p48, %p49
    %p51 = scmp.ne.s32.totalorder %s40, %s41
    %p52 = scmp.eq.s32.totalorder %s18, 0
    %p53 = por %p51, %p52
    %p54 = scmp.ne.s32.totalorder %s40, %s41
    %p55 = scmp.eq.s32.totalorder %s19, 3
    %p56 = por %p54, %p55
    %p58 = scmp.ne.s32.totalorder %s41, %s57
    %p59 = scmp.eq.s32.totalorder %s19, 0
    %p60 = por %p58, %p59
    %s62 = sadd.s32 %s61, 1
    %p65 = scmp.eq.s32.totalorder %s13, 3
    %p66 = scmp.ne.s32.totalorder %s61, %s63
    %p67 = scmp.eq.s32.totalorder %s13, 0
    %p68 = por %p66, %p67
    %p69 = scmp.ne.s32.totalorder %s61, %s63
    %p70 = scmp.eq.s32.totalorder %s18, 3
    %p71 = por %p69, %p70
    %p72 = scmp.ne.s32.totalorder %s63, %s64
    %p73 = scmp.eq.s32.totalorder %s18, 0
    %p74 = por %p72, %p73
    %p75 = scmp.ne.s32.totalorder %s63, %s64
    %p76 = scmp.eq.s32.totalorder %s19, 3
    %p77 = por %p75, %p76
    %p79 = scmp.ne.s32.totalorder %s64, %s78
    %p80 = scmp.eq.s32.totalorder %s19, 0
    %p81 = por %p79, %p80
    %s83 = sadd.s32 %s82, 1
    %p86 = scmp.eq.s32.totalorder %s13, 3
    %p87 = scmp.ne.s32.totalorder %s82, %s84
    %p88 = scmp.eq.s32.totalorder %s13, 0
    %p89 = por %p87, %p88
    %p90 = scmp.ne.s32.totalorder %s82, %s84
    %p91 = scmp.eq.s32.totalorder %s18, 3
    %p92 = por %p90, %p91
    %p93 = scmp.ne.s32.totalorder %s84, %s85
    %p94 = scmp.eq.s32.totalorder %s18, 0
    %p95 = por %p93, %p94
    %p96 = scmp.ne.s32.totalorder %s84, %s85
    %p97 = scmp.eq.s32.totalorder %s19, 3
    %p98 = por %p96, %p97
    %p100 = scmp.ne.s32.totalorder %s85, %s99
    %p101 = scmp.eq.s32.totalorder %s19, 0
    %p102 = por %p100, %p101
    %s104 = sadd.s32 %s103, 1
    %p107 = scmp.eq.s32.totalorder %s13, 3
    %p108 = scmp.ne.s32.totalorder %s103, %s105
    %p109 = scmp.eq.s32.totalorder %s13, 0
    %p110 = por %p108, %p109
    %p111 = scmp.ne.s32.totalorder %s103, %s105
    %p112 = scmp.eq.s32.totalorder %s18, 3
    %p113 = por %p111, %p112
    %p114 = scmp.ne.s32.totalorder %s105, %s106
    %p115 = scmp.eq.s32.totalorder %s18, 0
    %p116 = por %p114, %p115
    %p117 = scmp.ne.s32.totalorder %s105, %s106
    %p118 = scmp.eq.s32.totalorder %s19, 3
    %p119 = por %p117, %p118
    %p121 = scmp.ne.s32.totalorder %s106, %s120
    %p122 = scmp.eq.s32.totalorder %s19, 0
    %p123 = por %p121, %p122
    %s125 = sadd.s32 %s124, 1
    %p128 = scmp.eq.s32.totalorder %s13, 3
    %p129 = scmp.ne.s32.totalorder %s124, %s126
    %p130 = scmp.eq.s32.totalorder %s13, 0
    %p131 = por %p129, %p130
    %p132 = scmp.ne.s32.totalorder %s124, %s126
    %p133 = scmp.eq.s32.totalorder %s18, 3
    %p134 = por %p132, %p133
    %p135 = scmp.ne.s32.totalorder %s126, %s127
    %p136 = scmp.eq.s32.totalorder %s18, 0
    %p137 = por %p135, %p136
    %p138 = scmp.ne.s32.totalorder %s126, %s127
    %p139 = scmp.eq.s32.totalorder %s19, 3
    %p140 = por %p138, %p139
    %p142 = scmp.ne.s32.totalorder %s127, %s141
    %p143 = scmp.eq.s32.totalorder %s19, 0
    %p144 = por %p142, %p143
    %s146 = sadd.s32 %s145, 1
    %p149 = scmp.eq.s32.totalorder %s13, 3
    %p150 = scmp.ne.s32.totalorder %s145, %s147
    %p151 = scmp.eq.s32.totalorder %s13, 0
    %p152 = por %p150, %p151
    %p153 = scmp.ne.s32.totalorder %s145, %s147
    %p154 = scmp.eq.s32.totalorder %s18, 3
    %p155 = por %p153, %p154
    %p156 = scmp.ne.s32.totalorder %s147, %s148
    %p157 = scmp.eq.s32.totalorder %s18, 0
    %p158 = por %p156, %p157
    %p159 = scmp.ne.s32.totalorder %s147, %s148
    %p160 = scmp.eq.s32.totalorder %s19, 3
    %p161 = por %p159, %p160
    %p163 = scmp.ne.s32.totalorder %s148, %s162
    %p164 = scmp.eq.s32.totalorder %s19, 0
    %p165 = por %p163, %p164
    %s167 = sadd.s32 %s166, 1
    %p170 = scmp.eq.s32.totalorder %s13, 3
    %p171 = scmp.ne.s32.totalorder %s166, %s168
    %p172 = scmp.eq.s32.totalorder %s13, 0
    %p173 = por %p171, %p172
    %p174 = scmp.ne.s32.totalorder %s166, %s168
    %p175 = scmp.eq.s32.totalorder %s18, 3
    %p176 = por %p174, %p175
    %p177 = scmp.ne.s32.totalorder %s168, %s169
    %p178 = scmp.eq.s32.totalorder %s18, 0
    %p179 = por %p177, %p178
    %p180 = scmp.ne.s32.totalorder %s168, %s169
    %p181 = scmp.eq.s32.totalorder %s19, 3
    %p182 = por %p180, %p181
    %p184 = scmp.ne.s32.totalorder %s169, %s183
    %p185 = scmp.eq.s32.totalorder %s19, 0
    %p186 = por %p184, %p185
    %s187 = ssub.s32 %s20, %s32
    %s188 = ssub.s32 %s21, %s28
    %s189 = sor.u32 %s187, %s188
    %p190 = scmp.eq.s32.totalorder %s189, 0
    %s192 = sadd.s32 %s191, 1
    %s193 = scalar_select %p190, %s191, %s192
    %p196 = pneg %p190
    %p197 = scmp.eq.s32.totalorder %s13, 3
    %p198 = por %p196, %p197
    %p199 = scmp.ne.s32.totalorder %s191, %s194
    %p200 = scmp.eq.s32.totalorder %s13, 0
    %p201 = por %p199, %p200
    %p202 = scmp.ne.s32.totalorder %s191, %s194
    %p203 = scmp.eq.s32.totalorder %s18, 3
    %p204 = por %p202, %p203
    %p205 = scmp.ne.s32.totalorder %s194, %s195
    %p206 = scmp.eq.s32.totalorder %s18, 0
    %p207 = por %p205, %p206
    %p208 = scmp.ne.s32.totalorder %s194, %s195
    %p209 = scmp.eq.s32.totalorder %s19, 3
    %p210 = por %p208, %p209
    %p212 = scmp.ne.s32.totalorder %s195, %s211
    %p213 = scmp.eq.s32.totalorder %s19, 0
    %p214 = por %p212, %p213
    %p215 = scmp.le.s32.totalorder 1, %s13
    %p216 = scmp.lt.s32.totalorder %s13, 5
    %p217 = pnand %p215, %p216
    %p218 = pneg %p217
    // Predicated region
    $region9: #{actor_forward.1} parent=5 // pred_check
      _
    $region10: #{actor_forward.1} parent=5 // pred_check_branch
      %220 = sbr.rel (%p217) target = $region12
    $region11: #{actor_forward.1} parent=5 // pred_region
      %s221 = ssub.s32 %s13, 1
      // Predicated region
      $region13: #{actor_forward.1} parent=11 // pred_check
        %p222 = pneg %p74
      $region14: #{actor_forward.1} parent=11 // pred_check_branch
        %224 = sbr.rel (%p222) target = $region16
      $region15: #{actor_forward.1} parent=11 // pred_region
        _
      $region16: #{actor_forward.1} parent=11 // pred_fallthru
        _
      // Predicated region
      $region17: #{actor_forward.1} parent=11 // pred_check
        %p225 = pneg %p95
      $region18: #{actor_forward.1} parent=11 // pred_check_branch
        %227 = sbr.rel (%p225) target = $region20
      $region19: #{actor_forward.1} parent=11 // pred_region
        _
      $region20: #{actor_forward.1} parent=11 // pred_fallthru
        _
      // Predicated region
      $region21: #{actor_forward.1} parent=11 // pred_check
        %p228 = pneg %p116
      $region22: #{actor_forward.1} parent=11 // pred_check_branch
        %230 = sbr.rel (%p228) target = $region24
      $region23: #{actor_forward.1} parent=11 // pred_region
        _
      $region24: #{actor_forward.1} parent=11 // pred_fallthru
        _
      // Predicated region
      $region25: #{actor_forward.1} parent=11 // pred_check
        %p231 = pneg %p137
      $region26: #{actor_forward.1} parent=11 // pred_check_branch
        %233 = sbr.rel (%p231) target = $region28
      $region27: #{actor_forward.1} parent=11 // pred_region
        _
      $region28: #{actor_forward.1} parent=11 // pred_fallthru
        _
      // Predicated region
      $region29: #{actor_forward.1} parent=11 // pred_check
        %p234 = pneg %p158
      $region30: #{actor_forward.1} parent=11 // pred_check_branch
        %236 = sbr.rel (%p234) target = $region32
      $region31: #{actor_forward.1} parent=11 // pred_region
        _
      $region32: #{actor_forward.1} parent=11 // pred_fallthru
        _
      // Predicated region
      $region33: #{actor_forward.1} parent=11 // pred_check
        %p237 = pneg %p179
      $region34: #{actor_forward.1} parent=11 // pred_check_branch
        %239 = sbr.rel (%p237) target = $region36
      $region35: #{actor_forward.1} parent=11 // pred_region
        _
      $region36: #{actor_forward.1} parent=11 // pred_fallthru
        _
    $region12: #{actor_forward.1} parent=5 // pred_fallthru
      _
    %p240 = scmp.lt.s32.totalorder %s13, 4
    // Predicated region
    $region37: #{actor_forward.1} parent=5 // pred_check
      %p241 = pneg %p240
    $region38: #{actor_forward.1} parent=5 // pred_check_branch
      %243 = sbr.rel (%p241) target = $region40
    $region39: #{actor_forward.1} parent=5 // pred_region
      // Predicated region
      $region41: #{actor_forward.1} parent=39 // pred_check
        %p244 = pneg %p47
      $region42: #{actor_forward.1} parent=39 // pred_check_branch
        %246 = sbr.rel (%p244) target = $region44
      $region43: #{actor_forward.1} parent=39 // pred_region
        %s247 = smul.u32 8, %s21
        %p248 = scmp.lt.s32.totalorder %s20, 3
        %s249 = scalar_select %p248, %s20, 3
        %p250 = scmp.lt.s32.totalorder %s247, 7
        %s251 = scalar_select %p250, %s247, 7
        %s252 = smul.addr %s249, 8
        %s253 = sadd.s32 %s251, %s252
        %s254 = smul.addr %s253, 8
        %s255 = scalar_lea.vmem %s0, %s254
        %s256 = smul.u32 8, %s21
      $region44: #{actor_forward.1} parent=39 // pred_fallthru
        _
    $region40: #{actor_forward.1} parent=5 // pred_fallthru
      _
    %p257 = scmp.le.s32.totalorder 1, %s13
    %p258 = scmp.lt.s32.totalorder %s13, 5
    %p259 = pnand %p257, %p258
    %p260 = pneg %p259
    // Predicated region
    $region45: #{actor_forward.1} parent=5 // pred_check
      _
    $region46: #{actor_forward.1} parent=5 // pred_check_branch
      %262 = sbr.rel (%p259) target = $region48
    $region47: #{actor_forward.1} parent=5 // pred_region
      %s263 = ssub.s32 %s13, 1
      %s264 = smul.u32 8, %s23
      %p265 = scmp.lt.s32.totalorder %s22, 3
      %s266 = scalar_select %p265, %s22, 3
      %p267 = scmp.lt.s32.totalorder %s264, 7
      %s268 = scalar_select %p267, %s264, 7
      %s269 = smul.addr %s266, 8
      %s270 = sadd.s32 %s268, %s269
      %s271 = smul.addr %s270, 8
      %s272 = scalar_lea.vmem %s0, %s271
      %p273 = pneg %p53
      %p274 = pneg %p50
      %p275 = pneg %p74
      %p276 = pneg %p71
      %p277 = pneg %p95
      %p278 = pneg %p92
      %p279 = pneg %p116
      %p280 = pneg %p113
      %p281 = pneg %p137
      %p282 = pneg %p134
      %p283 = pneg %p158
      %p284 = pneg %p155
      %p285 = pneg %p179
      %p286 = pneg %p176
      %p287 = pneg %p207
      %p288 = pneg %p204
      %s289 = smul.u32 8, %s23
      %p290 = scmp.lt.s32.totalorder %s22, 3
      %s291 = scalar_select %p290, %s22, 3
      %p292 = scmp.lt.s32.totalorder %s289, 7
      %s293 = scalar_select %p292, %s289, 7
      %s294 = smul.addr %s291, 8
      %s295 = sadd.s32 %s293, %s294
      %s296 = smul.addr %s295, 8
      %s297 = scalar_lea.vmem %s7, %s296
      %s298 = smul.u32 8, %s23
      %p299 = scmp.lt.s32.totalorder %s22, 3
      %s300 = scalar_select %p299, %s22, 3
      %p301 = scmp.lt.s32.totalorder %s298, 7
      %s302 = scalar_select %p301, %s298, 7
      %s303 = smul.addr %s300, 8
      %s304 = sadd.s32 %s302, %s303
      %s305 = smul.addr %s304, 8
      %s306 = scalar_lea.vmem %s0, %s305
      %s307 = smul.u32 8, %s23
      %s308 = smul.u32 8, %s23
      %p309 = scmp.lt.s32.totalorder %s22, 3
      %s310 = scalar_select %p309, %s22, 3
      %p311 = scmp.lt.s32.totalorder %s308, 7
      %s312 = scalar_select %p311, %s308, 7
      %s313 = smul.addr %s310, 8
      %s314 = sadd.s32 %s312, %s313
      %s315 = smul.addr %s314, 8
      %s316 = scalar_lea.vmem %s7, %s315
      %s317 = smul.u32 8, %s23
      %v318 = vld [vmem:[%s306] sm:$0xff]
      %v319 = vld [vmem:[%s306 + $0x8] sm:$0xff]
      %v320 = vld [vmem:[%s306 + $0x10] sm:$0xff]
      %v321 = vld [vmem:[%s306 + $0x18] sm:$0xff]
      %v322 = vld [vmem:[%s306 + $0x20] sm:$0xff]
      %v323 = vld [vmem:[%s306 + $0x28] sm:$0xff]
      %v324 = vld [vmem:[%s306 + $0x30] sm:$0xff]
      %v325 = vld [vmem:[%s306 + $0x38] sm:$0xff]
      %s326 = smul.u32 %s22, 16
      %s327 = scalar_lea.vmem %s1, %s326
      %v328 = vld [vmem:[%s327] sm:$0xff]
      %v329 = vld [vmem:[%s327 + $0x8] sm:$0xff]
      %s330 = scalar_lea.vmem %s2, %s22
      %v331 = vld [vmem:[%s330] sm:$0x1]
      %v333 = vlaneseq
      %v334 = vshrl.u32 %v333, 7
      %v335 = vsub.s32 0, %v334
      %v336 = vrot.slane %v331, %v335
      %vm338 = vcmask 130048
      %v340 = vsel %vm338, %v318, 0
      %v343 = vsel %vm338, %v319, 0
      %v346 = vsel %vm338, %v320, 0
      %v349 = vsel %vm338, %v321, 0
      %v352 = vsel %vm338, %v322, 0
      %v355 = vsel %vm338, %v323, 0
      %v358 = vsel %vm338, %v324, 0
      %v361 = vsel %vm338, %v325, 0
      %363 = vmatprep.subr.mxu0 0.0
      %364 = vmatpush1.msra.mxu0 %v328
      %365 = vmatprep.subr.mxu0 0.0
      %366 = vmatpush1.msra.mxu0 %v329
      %367 = vmatprep.subr.mxu0 0.0
      %368 = vmatpush1.msra.mxu0 0.0
      %369 = vmatprep.subr.mxu0 0.0
      %370 = vmatpush1.msra.mxu0 0.0
      %371 = vmatprep.subr.mxu0 0.0
      %372 = vmatpush1.msra.mxu0 0.0
      %373 = vmatprep.subr.mxu0 0.0
      %374 = vmatpush1.msra.mxu0 0.0
      %375 = vmatprep.subr.mxu0 0.0
      %376 = vmatpush1.msra.mxu0 0.0
      %377 = vmatprep.subr.mxu0 0.0
      %378 = vmatpush1.msra.mxu0 0.0
      %379 = vmatprep.subr.mxu0 0.0
      %380 = vmatpush1.msra.mxu0 0.0
      %381 = vmatprep.subr.mxu0 0.0
      %382 = vmatpush1.msra.mxu0 0.0
      %383 = vmatprep.subr.mxu0 0.0
      %384 = vmatpush1.msra.mxu0 0.0
      %385 = vmatprep.subr.mxu0 0.0
      %386 = vmatpush1.msra.mxu0 0.0
      %387 = vmatprep.subr.mxu0 0.0
      %388 = vmatpush1.msra.mxu0 0.0
      %389 = vmatprep.subr.mxu0 0.0
      %390 = vmatpush1.msra.mxu0 0.0
      %391 = vmatprep.subr.mxu0 0.0
      %392 = vmatpush1.msra.mxu0 0.0
      %393 = vmatprep.subr.mxu0 0.0
      %394 = vmatpush1.msra.mxu0 0.0
      %395 = vmatprep.subr.mxu0 0.0
      %396 = vmatpush1.msra.mxu0 0.0
      %397 = vmatprep.subr.mxu0 0.0
      %398 = vmatpush1.msra.mxu0 0.0
      %399 = vmatprep.subr.mxu0 0.0
      %400 = vmatpush1.msra.mxu0 0.0
      %401 = vmatprep.subr.mxu0 0.0
      %402 = vmatpush1.msra.mxu0 0.0
      %403 = vmatprep.subr.mxu0 0.0
      %404 = vmatpush1.msra.mxu0 0.0
      %405 = vmatprep.subr.mxu0 0.0
      %406 = vmatpush1.msra.mxu0 0.0
      %407 = vmatprep.subr.mxu0 0.0
      %408 = vmatpush1.msra.mxu0 0.0
      %409 = vmatprep.subr.mxu0 0.0
      %410 = vmatpush1.msra.mxu0 0.0
      %411 = vmatprep.subr.mxu0 0.0
      %412 = vmatpush1.msra.mxu0 0.0
      %413 = vmatprep.subr.mxu0 0.0
      %414 = vmatpush1.msra.mxu0 0.0
      %415 = vmatprep.subr.mxu0 0.0
      %416 = vmatpush1.msra.mxu0 0.0
      %417 = vmatprep.subr.mxu0 0.0
      %418 = vmatpush1.msra.mxu0 0.0
      %419 = vmatprep.subr.mxu0 0.0
      %420 = vmatpush1.msra.mxu0 0.0
      %421 = vmatprep.subr.mxu0 0.0
      %422 = vmatpush1.msra.mxu0 0.0
      %423 = vmatprep.subr.mxu0 0.0
      %424 = vmatpush1.msra.mxu0 0.0
      %425 = vmatprep.subr.mxu0 0.0
      %426 = vmatpush1.msra.mxu0 0.0
      %427 = vmatprep.mubr.f32.mxu0 0.0
      %428 = vmatmul.mubr.f32.gmra.mrb[0].mxu0 %v340
      %v429 = vpop.f32.mrb[0].mxu0
      %v430 = vadd.f32 %v336, %v429
      %v431 = vpop.f32.mrb[0].mxu0
      %432 = vmatprep.mubr.f32.mxu0 0.0
      %433 = vmatmul.mubr.f32.gmra.mrb[0].mxu0 %v343
      %v434 = vpop.f32.mrb[0].mxu0
      %v435 = vadd.f32 %v336, %v434
      %v436 = vpop.f32.mrb[0].mxu0
      %437 = vmatprep.mubr.f32.mxu0 0.0
      %438 = vmatmul.mubr.f32.gmra.mrb[0].mxu0 %v346
      %v439 = vpop.f32.mrb[0].mxu0
      %v440 = vadd.f32 %v336, %v439
      %v441 = vpop.f32.mrb[0].mxu0
      %442 = vmatprep.mubr.f32.mxu0 0.0
      %443 = vmatmul.mubr.f32.gmra.mrb[0].mxu0 %v349
      %v444 = vpop.f32.mrb[0].mxu0
      %v445 = vadd.f32 %v336, %v444
      %v446 = vpop.f32.mrb[0].mxu0
      %447 = vmatprep.mubr.f32.mxu0 0.0
      %448 = vmatmul.mubr.f32.gmra.mrb[0].mxu0 %v352
      %v449 = vpop.f32.mrb[0].mxu0
      %v450 = vadd.f32 %v336, %v449
      %v451 = vpop.f32.mrb[0].mxu0
      %452 = vmatprep.mubr.f32.mxu0 0.0
      %453 = vmatmul.mubr.f32.gmra.mrb[0].mxu0 %v355
      %v454 = vpop.f32.mrb[0].mxu0
      %v455 = vadd.f32 %v336, %v454
      %v456 = vpop.f32.mrb[0].mxu0
      %457 = vmatprep.mubr.f32.mxu0 0.0
      %458 = vmatmul.mubr.f32.gmra.mrb[0].mxu0 %v358
      %v459 = vpop.f32.mrb[0].mxu0
      %v460 = vadd.f32 %v336, %v459
      %v461 = vpop.f32.mrb[0].mxu0
      %462 = vmatprep.mubr.f32.mxu0 0.0
      %463 = vmatmul.mubr.f32.gmra.mrb[0].mxu0 %v361
      %v464 = vpop.f32.mrb[0].mxu0
      %v465 = vadd.f32 %v336, %v464
      %v466 = vpop.f32.mrb[0].mxu0
      %467 = vdwg.mxu0
      %v468 = vmax.f32 %v430, 0.0
      %v469 = vmax.f32 %v435, 0.0
      %v470 = vmax.f32 %v440, 0.0
      %v471 = vmax.f32 %v445, 0.0
      %v472 = vmax.f32 %v450, 0.0
      %v473 = vmax.f32 %v455, 0.0
      %v474 = vmax.f32 %v460, 0.0
      %v475 = vmax.f32 %v465, 0.0
      %s476 = smul.u32 %s22, 128
      %s477 = scalar_lea.vmem %s3, %s476
      %v478 = vld [vmem:[%s477] sm:$0xff]
      %v479 = vld [vmem:[%s477 + $0x8] sm:$0xff]
      %v480 = vld [vmem:[%s477 + $0x10] sm:$0xff]
      %v481 = vld [vmem:[%s477 + $0x18] sm:$0xff]
      %v482 = vld [vmem:[%s477 + $0x20] sm:$0xff]
      %v483 = vld [vmem:[%s477 + $0x28] sm:$0xff]
      %v484 = vld [vmem:[%s477 + $0x30] sm:$0xff]
      %v485 = vld [vmem:[%s477 + $0x38] sm:$0xff]
      %v486 = vld [vmem:[%s477 + $0x40] sm:$0xff]
      %v487 = vld [vmem:[%s477 + $0x48] sm:$0xff]
      %v488 = vld [vmem:[%s477 + $0x50] sm:$0xff]
      %v489 = vld [vmem:[%s477 + $0x58] sm:$0xff]
      %v490 = vld [vmem:[%s477 + $0x60] sm:$0xff]
      %v491 = vld [vmem:[%s477 + $0x68] sm:$0xff]
      %v492 = vld [vmem:[%s477 + $0x70] sm:$0xff]
      %v493 = vld [vmem:[%s477 + $0x78] sm:$0xff]
      %s494 = scalar_lea.vmem %s4, %s22
      %v495 = vld [vmem:[%s494] sm:$0x1]
      %v497 = vlaneseq
      %v498 = vshrl.u32 %v497, 7
      %v499 = vsub.s32 0, %v498
      %v500 = vrot.slane %v495, %v499
      %502 = vmatprep.subr.mxu0 0.0
      %503 = vmatpush1.msra.mxu0 %v478
      %504 = vmatprep.subr.mxu0 0.0
      %505 = vmatpush1.msra.mxu0 %v479
      %506 = vmatprep.subr.mxu0 0.0
      %507 = vmatpush1.msra.mxu0 %v480
      %508 = vmatprep.subr.mxu0 0.0
      %509 = vmatpush1.msra.mxu0 %v481
      %510 = vmatprep.subr.mxu0 0.0
      %511 = vmatpush1.msra.mxu0 %v482
      %512 = vmatprep.subr.mxu0 0.0
      %513 = vmatpush1.msra.mxu0 %v483
      %514 = vmatprep.subr.mxu0 0.0
      %515 = vmatpush1.msra.mxu0 %v484
      %516 = vmatprep.subr.mxu0 0.0
      %517 = vmatpush1.msra.mxu0 %v485
      %518 = vmatprep.subr.mxu0 0.0
      %519 = vmatpush1.msra.mxu0 %v486
      %520 = vmatprep.subr.mxu0 0.0
      %521 = vmatpush1.msra.mxu0 %v487
      %522 = vmatprep.subr.mxu0 0.0
      %523 = vmatpush1.msra.mxu0 %v488
      %524 = vmatprep.subr.mxu0 0.0
      %525 = vmatpush1.msra.mxu0 %v489
      %526 = vmatprep.subr.mxu0 0.0
      %527 = vmatpush1.msra.mxu0 %v490
      %528 = vmatprep.subr.mxu0 0.0
      %529 = vmatpush1.msra.mxu0 %v491
      %530 = vmatprep.subr.mxu0 0.0
      %531 = vmatpush1.msra.mxu0 %v492
      %532 = vmatprep.subr.mxu0 0.0
      %533 = vmatpush1.msra.mxu0 %v493
      %534 = vmatprep.subr.mxu0 0.0
      %535 = vmatpush1.msra.mxu0 0.0
      %536 = vmatprep.subr.mxu0 0.0
      %537 = vmatpush1.msra.mxu0 0.0
      %538 = vmatprep.subr.mxu0 0.0
      %539 = vmatpush1.msra.mxu0 0.0
      %540 = vmatprep.subr.mxu0 0.0
      %541 = vmatpush1.msra.mxu0 0.0
      %542 = vmatprep.subr.mxu0 0.0
      %543 = vmatpush1.msra.mxu0 0.0
      %544 = vmatprep.subr.mxu0 0.0
      %545 = vmatpush1.msra.mxu0 0.0
      %546 = vmatprep.subr.mxu0 0.0
      %547 = vmatpush1.msra.mxu0 0.0
      %548 = vmatprep.subr.mxu0 0.0
      %549 = vmatpush1.msra.mxu0 0.0
      %550 = vmatprep.subr.mxu0 0.0
      %551 = vmatpush1.msra.mxu0 0.0
      %552 = vmatprep.subr.mxu0 0.0
      %553 = vmatpush1.msra.mxu0 0.0
      %554 = vmatprep.subr.mxu0 0.0
      %555 = vmatpush1.msra.mxu0 0.0
      %556 = vmatprep.subr.mxu0 0.0
      %557 = vmatpush1.msra.mxu0 0.0
      %558 = vmatprep.subr.mxu0 0.0
      %559 = vmatpush1.msra.mxu0 0.0
      %560 = vmatprep.subr.mxu0 0.0
      %561 = vmatpush1.msra.mxu0 0.0
      %562 = vmatprep.subr.mxu0 0.0
      %563 = vmatpush1.msra.mxu0 0.0
      %564 = vmatprep.subr.mxu0 0.0
      %565 = vmatpush1.msra.mxu0 0.0
      %566 = vmatprep.mubr.f32.mxu0 0.0
      %567 = vmatmul.mubr.f32.gmra.mrb[0].mxu0 %v468
      %v568 = vpop.f32.mrb[0].mxu0
      %v569 = vadd.f32 %v500, %v568
      %v570 = vpop.f32.mrb[0].mxu0
      %571 = vmatprep.mubr.f32.mxu0 0.0
      %572 = vmatmul.mubr.f32.gmra.mrb[0].mxu0 %v469
      %v573 = vpop.f32.mrb[0].mxu0
      %v574 = vadd.f32 %v500, %v573
      %v575 = vpop.f32.mrb[0].mxu0
      %576 = vmatprep.mubr.f32.mxu0 0.0
      %577 = vmatmul.mubr.f32.gmra.mrb[0].mxu0 %v470
      %v578 = vpop.f32.mrb[0].mxu0
      %v579 = vadd.f32 %v500, %v578
      %v580 = vpop.f32.mrb[0].mxu0
      %581 = vmatprep.mubr.f32.mxu0 0.0
      %582 = vmatmul.mubr.f32.gmra.mrb[0].mxu0 %v471
      %v583 = vpop.f32.mrb[0].mxu0
      %v584 = vadd.f32 %v500, %v583
      %v585 = vpop.f32.mrb[0].mxu0
      %586 = vmatprep.mubr.f32.mxu0 0.0
      %587 = vmatmul.mubr.f32.gmra.mrb[0].mxu0 %v472
      %v588 = vpop.f32.mrb[0].mxu0
      %v589 = vadd.f32 %v500, %v588
      %v590 = vpop.f32.mrb[0].mxu0
      %591 = vmatprep.mubr.f32.mxu0 0.0
      %592 = vmatmul.mubr.f32.gmra.mrb[0].mxu0 %v473
      %v593 = vpop.f32.mrb[0].mxu0
      %v594 = vadd.f32 %v500, %v593
      %v595 = vpop.f32.mrb[0].mxu0
      %596 = vmatprep.mubr.f32.mxu0 0.0
      %597 = vmatmul.mubr.f32.gmra.mrb[0].mxu0 %v474
      %v598 = vpop.f32.mrb[0].mxu0
      %v599 = vadd.f32 %v500, %v598
      %v600 = vpop.f32.mrb[0].mxu0
      %601 = vmatprep.mubr.f32.mxu0 0.0
      %602 = vmatmul.mubr.f32.gmra.mrb[0].mxu0 %v475
      %v603 = vpop.f32.mrb[0].mxu0
      %v604 = vadd.f32 %v500, %v603
      %v605 = vpop.f32.mrb[0].mxu0
      %606 = vdwg.mxu0
      %v607 = vmax.f32 %v569, 0.0
      %v608 = vmax.f32 %v574, 0.0
      %v609 = vmax.f32 %v579, 0.0
      %v610 = vmax.f32 %v584, 0.0
      %v611 = vmax.f32 %v589, 0.0
      %v612 = vmax.f32 %v594, 0.0
      %v613 = vmax.f32 %v599, 0.0
      %v614 = vmax.f32 %v604, 0.0
      %s615 = scalar_lea.vmem %s5, %s476
      %v616 = vld [vmem:[%s615] sm:$0xff]
      %v617 = vld [vmem:[%s615 + $0x8] sm:$0xff]
      %v618 = vld [vmem:[%s615 + $0x10] sm:$0xff]
      %v619 = vld [vmem:[%s615 + $0x18] sm:$0xff]
      %v620 = vld [vmem:[%s615 + $0x20] sm:$0xff]
      %v621 = vld [vmem:[%s615 + $0x28] sm:$0xff]
      %v622 = vld [vmem:[%s615 + $0x30] sm:$0xff]
      %v623 = vld [vmem:[%s615 + $0x38] sm:$0xff]
      %v624 = vld [vmem:[%s615 + $0x40] sm:$0xff]
      %v625 = vld [vmem:[%s615 + $0x48] sm:$0xff]
      %v626 = vld [vmem:[%s615 + $0x50] sm:$0xff]
      %v627 = vld [vmem:[%s615 + $0x58] sm:$0xff]
      %v628 = vld [vmem:[%s615 + $0x60] sm:$0xff]
      %v629 = vld [vmem:[%s615 + $0x68] sm:$0xff]
      %v630 = vld [vmem:[%s615 + $0x70] sm:$0xff]
      %v631 = vld [vmem:[%s615 + $0x78] sm:$0xff]
      %s632 = scalar_lea.vmem %s6, %s22
      %v633 = vld [vmem:[%s632] sm:$0x1]
      %v635 = vlaneseq
      %v636 = vshrl.u32 %v635, 7
      %v637 = vsub.s32 0, %v636
      %v638 = vrot.slane %v633, %v637
      %640 = vmatprep.subr.mxu0 0.0
      %641 = vmatpush1.msra.mxu0 %v616
      %642 = vmatprep.subr.mxu0 0.0
      %643 = vmatpush1.msra.mxu0 %v617
      %644 = vmatprep.subr.mxu0 0.0
      %645 = vmatpush1.msra.mxu0 %v618
      %646 = vmatprep.subr.mxu0 0.0
      %647 = vmatpush1.msra.mxu0 %v619
      %648 = vmatprep.subr.mxu0 0.0
      %649 = vmatpush1.msra.mxu0 %v620
      %650 = vmatprep.subr.mxu0 0.0
      %651 = vmatpush1.msra.mxu0 %v621
      %652 = vmatprep.subr.mxu0 0.0
      %653 = vmatpush1.msra.mxu0 %v622
      %654 = vmatprep.subr.mxu0 0.0
      %655 = vmatpush1.msra.mxu0 %v623
      %656 = vmatprep.subr.mxu0 0.0
      %657 = vmatpush1.msra.mxu0 %v624
      %658 = vmatprep.subr.mxu0 0.0
      %659 = vmatpush1.msra.mxu0 %v625
      %660 = vmatprep.subr.mxu0 0.0
      %661 = vmatpush1.msra.mxu0 %v626
      %662 = vmatprep.subr.mxu0 0.0
      %663 = vmatpush1.msra.mxu0 %v627
      %664 = vmatprep.subr.mxu0 0.0
      %665 = vmatpush1.msra.mxu0 %v628
      %666 = vmatprep.subr.mxu0 0.0
      %667 = vmatpush1.msra.mxu0 %v629
      %668 = vmatprep.subr.mxu0 0.0
      %669 = vmatpush1.msra.mxu0 %v630
      %670 = vmatprep.subr.mxu0 0.0
      %671 = vmatpush1.msra.mxu0 %v631
      %672 = vmatprep.subr.mxu0 0.0
      %673 = vmatpush1.msra.mxu0 0.0
      %674 = vmatprep.subr.mxu0 0.0
      %675 = vmatpush1.msra.mxu0 0.0
      %676 = vmatprep.subr.mxu0 0.0
      %677 = vmatpush1.msra.mxu0 0.0
      %678 = vmatprep.subr.mxu0 0.0
      %679 = vmatpush1.msra.mxu0 0.0
      %680 = vmatprep.subr.mxu0 0.0
      %681 = vmatpush1.msra.mxu0 0.0
      %682 = vmatprep.subr.mxu0 0.0
      %683 = vmatpush1.msra.mxu0 0.0
      %684 = vmatprep.subr.mxu0 0.0
      %685 = vmatpush1.msra.mxu0 0.0
      %686 = vmatprep.subr.mxu0 0.0
      %687 = vmatpush1.msra.mxu0 0.0
      %688 = vmatprep.subr.mxu0 0.0
      %689 = vmatpush1.msra.mxu0 0.0
      %690 = vmatprep.subr.mxu0 0.0
      %691 = vmatpush1.msra.mxu0 0.0
      %692 = vmatprep.subr.mxu0 0.0
      %693 = vmatpush1.msra.mxu0 0.0
      %694 = vmatprep.subr.mxu0 0.0
      %695 = vmatpush1.msra.mxu0 0.0
      %696 = vmatprep.subr.mxu0 0.0
      %697 = vmatpush1.msra.mxu0 0.0
      %698 = vmatprep.subr.mxu0 0.0
      %699 = vmatpush1.msra.mxu0 0.0
      %700 = vmatprep.subr.mxu0 0.0
      %701 = vmatpush1.msra.mxu0 0.0
      %702 = vmatprep.subr.mxu0 0.0
      %703 = vmatpush1.msra.mxu0 0.0
      %704 = vmatprep.mubr.f32.mxu0 0.0
      %705 = vmatmul.mubr.f32.gmra.mrb[0].mxu0 %v607
      %v706 = vpop.f32.mrb[0].mxu0
      %v707 = vadd.f32 %v638, %v706
      %v708 = vpop.f32.mrb[0].mxu0
      %709 = vmatprep.mubr.f32.mxu0 0.0
      %710 = vmatmul.mubr.f32.gmra.mrb[0].mxu0 %v608
      %v711 = vpop.f32.mrb[0].mxu0
      %v712 = vadd.f32 %v638, %v711
      %v713 = vpop.f32.mrb[0].mxu0
      %714 = vmatprep.mubr.f32.mxu0 0.0
      %715 = vmatmul.mubr.f32.gmra.mrb[0].mxu0 %v609
      %v716 = vpop.f32.mrb[0].mxu0
      %v717 = vadd.f32 %v638, %v716
      %v718 = vpop.f32.mrb[0].mxu0
      %719 = vmatprep.mubr.f32.mxu0 0.0
      %720 = vmatmul.mubr.f32.gmra.mrb[0].mxu0 %v610
      %v721 = vpop.f32.mrb[0].mxu0
      %v722 = vadd.f32 %v638, %v721
      %v723 = vpop.f32.mrb[0].mxu0
      %724 = vmatprep.mubr.f32.mxu0 0.0
      %725 = vmatmul.mubr.f32.gmra.mrb[0].mxu0 %v611
      %v726 = vpop.f32.mrb[0].mxu0
      %v727 = vadd.f32 %v638, %v726
      %v728 = vpop.f32.mrb[0].mxu0
      %729 = vmatprep.mubr.f32.mxu0 0.0
      %730 = vmatmul.mubr.f32.gmra.mrb[0].mxu0 %v612
      %v731 = vpop.f32.mrb[0].mxu0
      %v732 = vadd.f32 %v638, %v731
      %v733 = vpop.f32.mrb[0].mxu0
      %734 = vmatprep.mubr.f32.mxu0 0.0
      %735 = vmatmul.mubr.f32.gmra.mrb[0].mxu0 %v613
      %v736 = vpop.f32.mrb[0].mxu0
      %v737 = vadd.f32 %v638, %v736
      %v738 = vpop.f32.mrb[0].mxu0
      %739 = vmatprep.mubr.f32.mxu0 0.0
      %740 = vmatmul.mubr.f32.gmra.mrb[0].mxu0 %v614
      %v741 = vpop.f32.mrb[0].mxu0
      %v742 = vadd.f32 %v638, %v741
      %v743 = vpop.f32.mrb[0].mxu0
      %744 = vdwg.mxu0
      %745 = vmax.xlane.f32.xlu0 %v707
      %v746 = vpop.xlane.xlu0 %745
      %747 = vmax.xlane.f32.xlu0 %v712
      %v748 = vpop.xlane.xlu0 %747
      %749 = vmax.xlane.f32.xlu0 %v717
      %v750 = vpop.xlane.xlu0 %749
      %751 = vmax.xlane.f32.xlu0 %v722
      %v752 = vpop.xlane.xlu0 %751
      %753 = vmax.xlane.f32.xlu0 %v727
      %v754 = vpop.xlane.xlu0 %753
      %755 = vmax.xlane.f32.xlu0 %v732
      %v756 = vpop.xlane.xlu0 %755
      %757 = vmax.xlane.f32.xlu0 %v737
      %v758 = vpop.xlane.xlu0 %757
      %759 = vmax.xlane.f32.xlu0 %v742
      %v760 = vpop.xlane.xlu0 %759
      %v761 = vsub.f32 %v707, %v746
      %v762 = vsub.f32 %v712, %v748
      %v763 = vsub.f32 %v717, %v750
      %v764 = vsub.f32 %v722, %v752
      %v765 = vsub.f32 %v727, %v754
      %v766 = vsub.f32 %v732, %v756
      %v767 = vsub.f32 %v737, %v758
      %v768 = vsub.f32 %v742, %v760
      %v769 = vmul.f32 %v761, 1.442695
      %v770 = vpow.pop %v769
      %v771 = vmul.f32 %v762, 1.442695
      %v772 = vpow.pop %v771
      %v773 = vmul.f32 %v763, 1.442695
      %v774 = vpow.pop %v773
      %v775 = vmul.f32 %v764, 1.442695
      %v776 = vpow.pop %v775
      %v777 = vmul.f32 %v765, 1.442695
      %v778 = vpow.pop %v777
      %v779 = vmul.f32 %v766, 1.442695
      %v780 = vpow.pop %v779
      %v781 = vmul.f32 %v767, 1.442695
      %v782 = vpow.pop %v781
      %v783 = vmul.f32 %v768, 1.442695
      %v784 = vpow.pop %v783
      %785 = vadd.xlane.f32.xlu0 %v770
      %v786 = vpop.xlane.xlu0 %785
      %787 = vadd.xlane.f32.xlu0 %v772
      %v788 = vpop.xlane.xlu0 %787
      %789 = vadd.xlane.f32.xlu0 %v774
      %v790 = vpop.xlane.xlu0 %789
      %791 = vadd.xlane.f32.xlu0 %v776
      %v792 = vpop.xlane.xlu0 %791
      %793 = vadd.xlane.f32.xlu0 %v778
      %v794 = vpop.xlane.xlu0 %793
      %795 = vadd.xlane.f32.xlu0 %v780
      %v796 = vpop.xlane.xlu0 %795
      %797 = vadd.xlane.f32.xlu0 %v782
      %v798 = vpop.xlane.xlu0 %797
      %799 = vadd.xlane.f32.xlu0 %v784
      %v800 = vpop.xlane.xlu0 %799
      %v801 = vrcp.pop %v786
      %v802 = vmul.f32 1.0, %v801
      %v803 = vrcp.pop %v788
      %v804 = vmul.f32 1.0, %v803
      %v805 = vrcp.pop %v790
      %v806 = vmul.f32 1.0, %v805
      %v807 = vrcp.pop %v792
      %v808 = vmul.f32 1.0, %v807
      %v809 = vrcp.pop %v794
      %v810 = vmul.f32 1.0, %v809
      %v811 = vrcp.pop %v796
      %v812 = vmul.f32 1.0, %v811
      %v813 = vrcp.pop %v798
      %v814 = vmul.f32 1.0, %v813
      %v815 = vrcp.pop %v800
      %v816 = vmul.f32 1.0, %v815
      %v817 = vmul.f32 %v770, %v802
      %v818 = vmul.f32 %v772, %v804
      %v819 = vmul.f32 %v774, %v806
      %v820 = vmul.f32 %v776, %v808
      %v821 = vmul.f32 %v778, %v810
      %v822 = vmul.f32 %v780, %v812
      %v823 = vmul.f32 %v782, %v814
      %v824 = vmul.f32 %v784, %v816
      %825 = vst [vmem:[%s316] sm:$0xff] %v817
      %826 = vst [vmem:[%s316 + $0x8] sm:$0xff] %v818
      %827 = vst [vmem:[%s316 + $0x10] sm:$0xff] %v819
      %828 = vst [vmem:[%s316 + $0x18] sm:$0xff] %v820
      %829 = vst [vmem:[%s316 + $0x20] sm:$0xff] %v821
      %830 = vst [vmem:[%s316 + $0x28] sm:$0xff] %v822
      %831 = vst [vmem:[%s316 + $0x30] sm:$0xff] %v823
      %832 = vst [vmem:[%s316 + $0x38] sm:$0xff] %v824
      %s833 = smul.u32 8, %s23
      %p834 = scmp.lt.s32.totalorder %s22, 3
      %s835 = scalar_select %p834, %s22, 3
      %p836 = scmp.lt.s32.totalorder %s833, 7
      %s837 = scalar_select %p836, %s833, 7
      %s838 = smul.addr %s835, 8
      %s839 = sadd.s32 %s837, %s838
      %s840 = smul.addr %s839, 8
      %s841 = scalar_lea.vmem %s7, %s840
      // Predicated region
      $region49: #{actor_forward.1} parent=47 // pred_check
        %p842 = pneg %p204
      $region50: #{actor_forward.1} parent=47 // pred_check_branch
        %844 = sbr.rel (%p842) target = $region52
      $region51: #{actor_forward.1} parent=47 // pred_region
        %s845 = smul.u32 8, %s23
      $region52: #{actor_forward.1} parent=47 // pred_fallthru
        _
    $region48: #{actor_forward.1} parent=5 // pred_fallthru
      _
    %p846 = scmp.le.s32.totalorder 2, %s13
    // Predicated region
    $region53: #{actor_forward.1} parent=5 // pred_check
      %p847 = pneg %p846
    $region54: #{actor_forward.1} parent=5 // pred_check_branch
      %849 = sbr.rel (%p847) target = $region56
    $region55: #{actor_forward.1} parent=5 // pred_region
      %s850 = ssub.s32 %s13, 2
      // Predicated region
      $region57: #{actor_forward.1} parent=55 // pred_check
        %p851 = pneg %p210
      $region58: #{actor_forward.1} parent=55 // pred_check_branch
        %853 = sbr.rel (%p851) target = $region60
      $region59: #{actor_forward.1} parent=55 // pred_region
        %s854 = smul.u32 8, %s25
        %p855 = scmp.lt.s32.totalorder %s24, 3
        %s856 = scalar_select %p855, %s24, 3
        %p857 = scmp.lt.s32.totalorder %s854, 7
        %s858 = scalar_select %p857, %s854, 7
        %s859 = smul.addr %s856, 8
        %s860 = sadd.s32 %s858, %s859
        %s861 = smul.addr %s860, 8
        %s862 = scalar_lea.vmem %s7, %s861
      $region60: #{actor_forward.1} parent=55 // pred_fallthru
        _
    $region56: #{actor_forward.1} parent=5 // pred_fallthru
      _
  $region6: #{actor_forward.1} parent=0 // loop_footer
    %s17 = sadd.s32 1, %s13
  $region7: #{actor_forward.1} parent=0 // loop_footer_branch
    %12 = sbr.rel target = $region3
  $region8: #{actor_forward.1} parent=0 // loop_exit
    _

</llo_original>
